<compile_context>
chip_gen: v6e
topology: v6e:2x2x1
jax: 0.10.0
libtpu: 0.0.40
codegen_flags: <defaults>
</compile_context>

<pallas_src>
import jax
import jax.numpy as jnp
from jax.experimental import pallas as pl
from jax.experimental.pallas import tpu as pltpu


def _h_sigmoid_kernel(x_ref, o_ref):
    x = x_ref[...]
    # relu6(x + 3) / 6 — computed in the input dtype (bf16 stays bf16 end-to-end).
    o_ref[...] = (jnp.clip(x + 3.0, 0.0, 6.0) * (1.0 / 6.0)).astype(o_ref.dtype)


def h_sigmoid(x, *, block_rows=4096, lane=128, min_blocks=8):
    """Elementwise hard-sigmoid. Accepts any shape (e.g. NCHW)."""
    orig_shape = x.shape
    orig_dtype = x.dtype
    n = x.size

    # Flatten to a lane-dense 2-D slab. Pad only up to a multiple of the
    # 128-lane width (NOT up to a whole block). For typical conv activation
    # shapes (C*H*W a multiple of 128) this is a pure metadata reshape with
    # zero extra HBM traffic and no slice-back copy afterwards.
    x_flat = jnp.ravel(x)
    n_pad = pl.cdiv(n, lane) * lane
    padded = n_pad != n
    if padded:
        x_flat = jnp.pad(x_flat, (0, n_pad - n))
    rows = n_pad // lane
    x2d = x_flat.reshape(rows, lane)

    # Pick the block height:
    #  - cap at `block_rows` (4096 x 128 f32 = 2 MiB; pipelined 2-in + 2-out
    #    buffers = 8 MiB, safe on v5e's 16 MiB scoped VMEM and v7x's 32 MiB).
    #  - for medium tensors, target >= `min_blocks` grid steps so the
    #    "parallel" grid axis can shard across both v7x TensorCores.
    #  - ragged final block is fine (elementwise; Pallas masks the tail).
    sub = 16  # sublane multiple safe for both f32 and bf16 packing
    if rows <= sub:
        br = rows  # single small block equal to the full dim (always legal)
    else:
        target = pl.cdiv(rows, min_blocks)
        target = pl.cdiv(target, sub) * sub
        br = min(block_rows, target)

    grid = (pl.cdiv(rows, br),)
    out2d = pl.pallas_call(
        _h_sigmoid_kernel,
        out_shape=jax.ShapeDtypeStruct((rows, lane), orig_dtype),
        grid=grid,
        in_specs=[pl.BlockSpec((br, lane), lambda i: (i, 0))],
        out_specs=pl.BlockSpec((br, lane), lambda i: (i, 0)),
        compiler_params=pltpu.CompilerParams(
            dimension_semantics=("parallel",)
        ),
    )(x2d)

    if padded:
        # Only taken when n % 128 != 0; tail handling costs one small slice.
        return out2d.reshape(-1)[:n].reshape(orig_shape)
    return out2d.reshape(orig_shape)


if __name__ == "__main__":
    key = jax.random.PRNGKey(0)
    # NCHW input, as a conv-style activation tensor would be.
    x = jax.random.normal(key, (2, 4, 16, 16), dtype=jnp.float32) * 4.0

    out = h_sigmoid(x)
    out = jax.block_until_ready(out)

    # Reference check (pure JAX).
    ref = jnp.clip(x + 3.0, 0.0, 6.0) / 6.0
    assert out.shape == x.shape
    assert out.dtype == x.dtype
    assert jnp.max(jnp.abs(out - ref)) < 1e-6

    print("KERNEL_OK")
</pallas_src>

<mosaic_0001>
module attributes {stable_mosaic.version = 11 : i64} {
  func.func @_h_sigmoid_kernel(%arg0: i32, %arg1: memref<16x128xf32, #tpu.memory_space<vmem>>, %arg2: memref<16x128xf32, #tpu.memory_space<vmem>>) attributes {dimension_semantics = [#tpu.dimension_semantics<parallel>], iteration_bounds = array<i64: 1>, scalar_prefetch = 0 : i64, scratch_operands = 0 : i64, tpu.core_type = #tpu.core_type<tc>, window_params = [{transform_indices = @transform_0, window_bounds = array<i64: 16, 128>}, {transform_indices = @transform_1, window_bounds = array<i64: 16, 128>}]} {
    %c0 = arith.constant 0 : index
    %c0_0 = arith.constant 0 : index
    %0 = vector.load %arg1[%c0, %c0_0] : memref<16x128xf32, #tpu.memory_space<vmem>>, vector<16x128xf32>
    %cst = arith.constant 3.000000e+00 : f32
    %1 = vector.broadcast %cst : f32 to vector<16x128xf32>
    %2 = arith.addf %0, %1 : vector<16x128xf32>
    %cst_1 = arith.constant 0.000000e+00 : f32
    %cst_2 = arith.constant 6.000000e+00 : f32
    %3 = vector.broadcast %cst_1 : f32 to vector<16x128xf32>
    %4 = arith.maximumf %3, %2 : vector<16x128xf32>
    %5 = vector.broadcast %cst_2 : f32 to vector<16x128xf32>
    %6 = arith.minimumf %5, %4 : vector<16x128xf32>
    %cst_3 = arith.constant 0.166666672 : f32
    %7 = vector.broadcast %cst_3 : f32 to vector<16x128xf32>
    %8 = arith.mulf %6, %7 : vector<16x128xf32>
    %c0_4 = arith.constant 0 : index
    %c0_5 = arith.constant 0 : index
    %9 = vector.load %arg2[%c0_4, %c0_5] : memref<16x128xf32, #tpu.memory_space<vmem>>, vector<16x128xf32>
    tpu.vector_store %arg2[%c0_4, %c0_5], %8 {strides = array<i32>} : memref<16x128xf32, #tpu.memory_space<vmem>>, vector<16x128xf32>,
    return
  }
  func.func @transform_0(%arg0: i32) -> (i32, i32) {
    %c0_i32 = arith.constant 0 : i32
    %c0_i32_0 = arith.constant 0 : i32
    return %arg0, %c0_i32 : i32, i32
  }
  func.func @transform_1(%arg0: i32) -> (i32, i32) {
    %c0_i32 = arith.constant 0 : i32
    %c0_i32_0 = arith.constant 0 : i32
    return %arg0, %c0_i32 : i32, i32
  }
}

</mosaic_0001>

<llo_original>
// kernel: tpu_custom_call.1
$region0: #{tpu_custom_call.1}
  #allocation0 [shape = 'u32[]', space=smem, size = 0x4, offset = 0x4, fixed_abs, tag = 'smem constant byte address 0x4 - core index']
  #allocation1 [shape = 'u32[144,128]{1,0:T(1,128)}', space=vmem, size = 0x12000, scoped, tag = 'internal scratch']
  %s0 = inlined_call_operand.hbm [shape: f32[16,128], index: 0, kind: input, shape index: {}]
  %s1 = inlined_call_operand.hbm [shape: f32[16,128], index: 1, kind: output, shape index: {}]
  %s2 = sld [smem:[#allocation0]]
  $region18: #{tpu_custom_call.1} parent=0
    _
  %s4 = ssub.s32 1, %s2
  %s5 = scalar_select 0, %s4, %s2
  $region1: #{tpu_custom_call.1} parent=0
    #allocation2 [shape = 'u8[8192]{0}', space=vmem, size = 0x2000, scoped, tag = 'input window, operand 0, single buffered']
    #allocation3 [shape = 's32[1]{0}', space=sflag, size = 0x4, scoped, tag = 'scoped memory for tpu_custom_call.1']
    #allocation4 [shape = 's32[1]{0}', space=sflag, size = 0x4, scoped, tag = 'scoped memory for tpu_custom_call.1']
    #allocation5 [shape = 'u8[8192]{0}', space=vmem, size = 0x2000, scoped, tag = 'output window, operand 0, single buffered']
    %6 = vsyncpa [#allocation3], 0
    %7 = vsyncpa [#allocation4], 0
    // Predicated region
    $region2: #{tpu_custom_call.1} parent=1 // pred_check
      _
    $region3: #{tpu_custom_call.1} parent=1 // pred_check_branch
      %9 = sbr.rel (0) target = $region5
    $region4: #{tpu_custom_call.1} parent=1 // pred_region
      %s11 = ssub.s32 256, 256
      %12 = vsyncadd [#allocation3], %s11
      %s13 = sshll.u32 [#allocation2], 4
      %s14 = int_to_ptr.vmem [resolvable:$true] %s13
      %19 = dma.hbm_to_vmem [thread:$0]  %s0, 256, %s14, [#allocation3], 128, 128, 8
    $region5: #{tpu_custom_call.1} parent=1 // pred_fallthru
      _
    // Predicated region
    $region6: #{tpu_custom_call.1} parent=1 // pred_check
      _
    $region7: #{tpu_custom_call.1} parent=1 // pred_check_branch
      %21 = sbr.rel (0) target = $region9
    $region8: #{tpu_custom_call.1} parent=1 // pred_region
      %22 = dma.done [#allocation3], 256
    $region9: #{tpu_custom_call.1} parent=1 // pred_fallthru
      _
    %v23 = vld [vmem:[#allocation2] sm:$0xff]
    %v24 = vld [vmem:[#allocation2 + $0x8] sm:$0xff]
    %v25 = vadd.f32 %v23, 3.0
    %v26 = vadd.f32 %v24, 3.0
    %v27 = vmax.f32 %v25, 0.0
    %v28 = vmax.f32 %v26, 0.0
    %v29 = vmin.f32 %v27, 6.0
    %v30 = vmin.f32 %v28, 6.0
    %v31 = vmul.f32 %v29, 0.16666667
    %v32 = vmul.f32 %v30, 0.16666667
    %33 = vst [vmem:[#allocation5] sm:$0xff] %v31
    %34 = vst [vmem:[#allocation5 + $0x8] sm:$0xff] %v32
    // Predicated region
    $region10: #{tpu_custom_call.1} parent=1 // pred_check
      _
    $region11: #{tpu_custom_call.1} parent=1 // pred_check_branch
      %36 = sbr.rel (0) target = $region13
    $region12: #{tpu_custom_call.1} parent=1 // pred_region
      %s38 = ssub.s32 256, 256
      %39 = vsyncadd [#allocation4], %s38
      %s40 = sshll.u32 [#allocation5], 4
      %s41 = int_to_ptr.vmem [resolvable:$true] %s40
      %46 = dma.vmem_to_hbm [thread:$0]  %s41, 256, %s1, [#allocation4], 128, 128, 8
    $region13: #{tpu_custom_call.1} parent=1 // pred_fallthru
      _
    // Predicated region
    $region14: #{tpu_custom_call.1} parent=1 // pred_check
      _
    $region15: #{tpu_custom_call.1} parent=1 // pred_check_branch
      %48 = sbr.rel (0) target = $region17
    $region16: #{tpu_custom_call.1} parent=1 // pred_region
      %49 = dma.done [#allocation4], 256
    $region17: #{tpu_custom_call.1} parent=1 // pred_fallthru
      _
    %50 = vsyncpa [#allocation3], 1
    %51 = vsyncpa [#allocation4], 1

</llo_original>
